<compile_context>
chip_gen: v7x
topology: tpu7x:2x2x1
jax: 0.10.0
libtpu: 0.0.40
codegen_flags: <defaults>
</compile_context>

<pallas_src>
import functools

import jax
import jax.numpy as jnp
from jax.experimental import pallas as pl
from jax.experimental.pallas import tpu as pltpu


# ----------------------------------------------------------------------------
# Shared tile computation: fc1 -> sigmoid -> fc2 -> sigmoid.
# ----------------------------------------------------------------------------
def _forward_tile(x, w1, b1, w2, b2, mm_dtype):
    h = jnp.dot(x.astype(mm_dtype), w1, preferred_element_type=jnp.float32)
    h = jax.nn.sigmoid(h + b1)                              # (tm, n_hid) f32
    y = jnp.dot(h.astype(mm_dtype), w2, preferred_element_type=jnp.float32)
    y = jax.nn.sigmoid(y + b2)                              # (tm, n_out) f32
    return y


# ----------------------------------------------------------------------------
# Pass 1: per-tile BN moments (sum, sum of squares) of the activations.
# ----------------------------------------------------------------------------
def _stats_kernel(x_ref, w1_ref, b1_ref, w2_ref, b2_ref, s1_ref, s2_ref,
                  *, n_valid, tm, mm_dtype, padded):
    y = _forward_tile(x_ref[...], w1_ref[...], b1_ref[...],
                      w2_ref[...], b2_ref[...], mm_dtype)

    # Rows that are pure padding (N rounded up to a multiple of the tile) are
    # masked out so they never pollute the batch statistics.
    if padded:
        row0 = pl.program_id(0) * tm
        rows = row0 + jax.lax.broadcasted_iota(jnp.int32, (tm, 1), 0)
        y = jnp.where(rows < n_valid, y, 0.0)

    n_out = y.shape[-1]
    s1 = jnp.sum(y, axis=0).reshape(1, 1, n_out)
    s2 = jnp.sum(y * y, axis=0).reshape(1, 1, n_out)
    # Broadcast to 8 sublanes so the (1, 8, n_out) output block is layout-legal.
    s1_ref[...] = jnp.broadcast_to(s1, s1_ref.shape)
    s2_ref[...] = jnp.broadcast_to(s2, s2_ref.shape)


# ----------------------------------------------------------------------------
# Pass 2: recompute activations and apply folded BN affine  o = y*scale + shift.
# ----------------------------------------------------------------------------
def _apply_kernel(x_ref, w1_ref, b1_ref, w2_ref, b2_ref,
                  scale_ref, shift_ref, o_ref, *, mm_dtype):
    y = _forward_tile(x_ref[...], w1_ref[...], b1_ref[...],
                      w2_ref[...], b2_ref[...], mm_dtype)
    o_ref[...] = y * scale_ref[...] + shift_ref[...]


def _round_up(x, m):
    return ((x + m - 1) // m) * m


@functools.partial(jax.jit, static_argnames=("use_bf16_matmul", "tile_rows"))
def enc_linear_forward(inputs, w1, b1, w2, b2, gamma, beta,
                       *, use_bf16_matmul=True, tile_rows=2048):
    """inputs: (B, T, n_in) float32. Returns (B, T, n_out) float32.

    Weights are stored transposed relative to torch ((in, out)) so x @ W works.
    """
    B, T, n_in = inputs.shape
    n_hid = w1.shape[1]
    n_out = w2.shape[1]
    N = B * T

    mm_dtype = jnp.bfloat16 if use_bf16_matmul else jnp.float32

    # ---- Row tiling -------------------------------------------------------
    # At these narrow feature dims even 2048-row tiles use well under 1 MiB
    # per double-buffered operand, far inside the v7x scoped-VMEM budget.
    tm = min(tile_rows, _round_up(N, 8))
    tm = _round_up(tm, 8)
    num_tiles = -(-N // tm)          # cdiv
    Npad = num_tiles * tm
    padded = Npad != N

    x2d = inputs.reshape(N, n_in)
    if padded:
        x2d = jnp.pad(x2d, ((0, Npad - N), (0, 0)))

    w1c = w1.astype(mm_dtype)        # cast once in the wrapper, stay resident
    w2c = w2.astype(mm_dtype)
    b1_2d = b1.reshape(1, n_hid).astype(jnp.float32)
    b2_2d = b2.reshape(1, n_out).astype(jnp.float32)

    cparams = pltpu.CompilerParams(
        dimension_semantics=("parallel",),      # shard row tiles over 2 TCs
        vmem_limit_bytes=32 * 1024 * 1024,
    )

    w_bytes = (w1c.size * w1c.dtype.itemsize + w2c.size * w2c.dtype.itemsize
               + 4 * (n_hid + n_out))
    mm_flops = 2 * Npad * (n_in * n_hid + n_hid * n_out)
    transc = Npad * (n_hid + n_out)

    # ---- Pass 1: per-tile BN moments --------------------------------------
    kernel1 = functools.partial(
        _stats_kernel, n_valid=N, tm=tm, mm_dtype=mm_dtype, padded=padded)

    s1_t, s2_t = pl.pallas_call(
        kernel1,
        out_shape=(
            jax.ShapeDtypeStruct((num_tiles, 8, n_out), jnp.float32),
            jax.ShapeDtypeStruct((num_tiles, 8, n_out), jnp.float32),
        ),
        grid=(num_tiles,),
        in_specs=[
            pl.BlockSpec((tm, n_in), lambda i: (i, 0)),
            pl.BlockSpec((n_in, n_hid), lambda i: (0, 0)),   # VMEM-resident
            pl.BlockSpec((1, n_hid), lambda i: (0, 0)),
            pl.BlockSpec((n_hid, n_out), lambda i: (0, 0)),
            pl.BlockSpec((1, n_out), lambda i: (0, 0)),
        ],
        out_specs=(
            pl.BlockSpec((1, 8, n_out), lambda i: (i, 0, 0)),
            pl.BlockSpec((1, 8, n_out), lambda i: (i, 0, 0)),
        ),
        compiler_params=cparams,
        cost_estimate=pl.CostEstimate(
            flops=mm_flops + 5 * Npad * n_out,
            transcendentals=transc,
            bytes_accessed=4 * (Npad * n_in + 2 * num_tiles * 8 * n_out)
            + w_bytes),
    )(x2d, w1c, b1_2d, w2c, b2_2d)

    # ---- Tiny global stat reduction + folded affine (plain XLA, O(n_out)) --
    s1 = s1_t[:, 0, :].sum(axis=0)                 # (n_out,)
    s2 = s2_t[:, 0, :].sum(axis=0)
    mean = s1 / N
    var = jnp.maximum(s2 / N - mean * mean, 0.0)   # biased var (training BN)
    inv_std = jax.lax.rsqrt(var + 1e-5)
    scale = (gamma.astype(jnp.float32) * inv_std).reshape(1, n_out)
    shift = (beta.astype(jnp.float32) - mean * gamma.astype(jnp.float32)
             * inv_std).reshape(1, n_out)

    # ---- Pass 2: recompute activations, apply folded BN, write output ------
    kernel2 = functools.partial(_apply_kernel, mm_dtype=mm_dtype)

    out2d = pl.pallas_call(
        kernel2,
        out_shape=jax.ShapeDtypeStruct((Npad, n_out), jnp.float32),
        grid=(num_tiles,),
        in_specs=[
            pl.BlockSpec((tm, n_in), lambda i: (i, 0)),
            pl.BlockSpec((n_in, n_hid), lambda i: (0, 0)),
            pl.BlockSpec((1, n_hid), lambda i: (0, 0)),
            pl.BlockSpec((n_hid, n_out), lambda i: (0, 0)),
            pl.BlockSpec((1, n_out), lambda i: (0, 0)),
            pl.BlockSpec((1, n_out), lambda i: (0, 0)),
            pl.BlockSpec((1, n_out), lambda i: (0, 0)),
        ],
        out_specs=pl.BlockSpec((tm, n_out), lambda i: (i, 0)),
        compiler_params=cparams,
        cost_estimate=pl.CostEstimate(
            flops=mm_flops + 2 * Npad * n_out,
            transcendentals=transc,
            bytes_accessed=4 * (Npad * n_in + Npad * n_out + 2 * n_out)
            + w_bytes),
    )(x2d, w1c, b1_2d, w2c, b2_2d, scale, shift)

    return out2d[:N].reshape(B, T, n_out)


# ----------------------------------------------------------------------------
# Reference + test harness
# ----------------------------------------------------------------------------
def _reference(inputs, w1, b1, w2, b2, gamma, beta):
    B, T, n_in = inputs.shape
    N = B * T
    x = inputs.reshape(N, n_in)
    hp = jax.lax.Precision.HIGHEST
    h = jax.nn.sigmoid(jnp.dot(x, w1, precision=hp) + b1)
    y = jax.nn.sigmoid(jnp.dot(h, w2, precision=hp) + b2)
    mean = y.mean(axis=0, keepdims=True)
    var = ((y - mean) ** 2).mean(axis=0, keepdims=True)
    out = gamma * (y - mean) / jnp.sqrt(var + 1e-5) + beta
    return out.reshape(B, T, -1)


def _xavier_normal(key, fan_in, fan_out):
    # matches nn.init.xavier_normal_: std = sqrt(2 / (fan_in + fan_out))
    std = (2.0 / (fan_in + fan_out)) ** 0.5
    return jax.random.normal(key, (fan_in, fan_out), dtype=jnp.float32) * std


if __name__ == "__main__":
    # Small shapes consistent with the module's forward: (B, T, n_in)
    B, T = 2, 8
    n_in, n_hid, n_out = 16, 32, 16

    key = jax.random.PRNGKey(0)
    k_x, k_x2, k_w1, k_w2 = jax.random.split(key, 4)

    inputs = jax.random.normal(k_x, (B, T, n_in), dtype=jnp.float32)

    # Deterministic parameter init mirroring Enc_linear.init_weights():
    #   Linear weights: xavier_normal, biases: 0.1; BatchNorm: weight=1, bias=0
    w1 = _xavier_normal(k_w1, n_in, n_hid)
    b1 = jnp.full((n_hid,), 0.1, dtype=jnp.float32)
    w2 = _xavier_normal(k_w2, n_hid, n_out)
    b2 = jnp.full((n_out,), 0.1, dtype=jnp.float32)
    gamma = jnp.ones((n_out,), dtype=jnp.float32)
    beta = jnp.zeros((n_out,), dtype=jnp.float32)

    ref = _reference(inputs, w1, b1, w2, b2, gamma, beta)

    # 1) Default (bf16 matmul operands, f32 accumulation / elementwise).
    out_bf16 = enc_linear_forward(inputs, w1, b1, w2, b2, gamma, beta)
    out_bf16 = jax.block_until_ready(out_bf16)
    assert out_bf16.shape == (B, T, n_out)
    assert jnp.allclose(out_bf16, ref, atol=3e-2, rtol=3e-2), \
        "bf16-matmul kernel mismatch vs reference"

    # 2) Full f32 matmuls: tight numerical check of the fused math + BN.
    out_f32 = enc_linear_forward(inputs, w1, b1, w2, b2, gamma, beta,
                                 use_bf16_matmul=False)
    out_f32 = jax.block_until_ready(out_f32)
    assert jnp.allclose(out_f32, ref, atol=1e-3, rtol=1e-3), \
        "f32-matmul kernel mismatch vs reference"

    # 3) Multi-tile + row-padding path: N=82 rows, 32-row tiles -> 3 tiles,
    #    96 padded rows; two-pass BN across tiles must still give batch stats.
    B2, T2 = 2, 41
    inputs2 = jax.random.normal(k_x2, (B2, T2, n_in), dtype=jnp.float32)
    ref2 = _reference(inputs2, w1, b1, w2, b2, gamma, beta)
    out2 = enc_linear_forward(inputs2, w1, b1, w2, b2, gamma, beta,
                              use_bf16_matmul=False, tile_rows=32)
    out2 = jax.block_until_ready(out2)
    assert out2.shape == (B2, T2, n_out)
    assert jnp.allclose(out2, ref2, atol=1e-3, rtol=1e-3), \
        "tiled (multi-block) kernel mismatch vs reference"

    print("KERNEL_OK")
</pallas_src>

<mosaic_0001>
module attributes {stable_mosaic.version = 11 : i64} {
  func.func @_stats_kernel(%arg0: i32, %arg1: memref<16x16xf32, #tpu.memory_space<vmem>>, %arg2: memref<16x32xbf16, #tpu.memory_space<vmem>>, %arg3: memref<1x32xf32, #tpu.memory_space<vmem>>, %arg4: memref<32x16xbf16, #tpu.memory_space<vmem>>, %arg5: memref<1x16xf32, #tpu.memory_space<vmem>>, %arg6: memref<1x8x16xf32, #tpu.memory_space<vmem>>, %arg7: memref<1x8x16xf32, #tpu.memory_space<vmem>>) attributes {dimension_semantics = [#tpu.dimension_semantics<parallel>], iteration_bounds = array<i64: 1>, scalar_prefetch = 0 : i64, scratch_operands = 0 : i64, tpu.core_type = #tpu.core_type<tc>, window_params = [{transform_indices = @transform_0, window_bounds = array<i64: 16, 16>}, {pipeline_mode = #tpu.pipeline_mode<synchronous>, transform_indices = @transform_1, window_bounds = array<i64: 16, 32>}, {pipeline_mode = #tpu.pipeline_mode<synchronous>, transform_indices = @transform_2, window_bounds = array<i64: 1, 32>}, {pipeline_mode = #tpu.pipeline_mode<synchronous>, transform_indices = @transform_3, window_bounds = array<i64: 32, 16>}, {pipeline_mode = #tpu.pipeline_mode<synchronous>, transform_indices = @transform_4, window_bounds = array<i64: 1, 16>}, {transform_indices = @transform_5, window_bounds = array<i64: 1, 8, 16>}, {transform_indices = @transform_6, window_bounds = array<i64: 1, 8, 16>}]} {
    %c0 = arith.constant 0 : index
    %c0_0 = arith.constant 0 : index
    %0 = vector.load %arg1[%c0, %c0_0] : memref<16x16xf32, #tpu.memory_space<vmem>>, vector<16x16xf32>
    %c0_1 = arith.constant 0 : index
    %c0_2 = arith.constant 0 : index
    %1 = vector.load %arg2[%c0_1, %c0_2] : memref<16x32xbf16, #tpu.memory_space<vmem>>, vector<16x32xbf16>
    %c0_3 = arith.constant 0 : index
    %c0_4 = arith.constant 0 : index
    %2 = vector.load %arg3[%c0_3, %c0_4] : memref<1x32xf32, #tpu.memory_space<vmem>>, vector<1x32xf32>
    %c0_5 = arith.constant 0 : index
    %c0_6 = arith.constant 0 : index
    %3 = vector.load %arg4[%c0_5, %c0_6] : memref<32x16xbf16, #tpu.memory_space<vmem>>, vector<32x16xbf16>
    %c0_7 = arith.constant 0 : index
    %c0_8 = arith.constant 0 : index
    %4 = vector.load %arg5[%c0_7, %c0_8] : memref<1x16xf32, #tpu.memory_space<vmem>>, vector<1x16xf32>
    %5 = arith.truncf %0 : vector<16x16xf32> to vector<16x16xbf16>
    %cst = arith.constant dense<0.000000e+00> : vector<16x32xf32>
    %6 = tpu.matmul %5, %1, %cst {dimension_numbers = #tpu.dot_dimension_numbers<[1], [0], [0], [1], [0, 0, 1, 1], [], []>} : vector<16x16xbf16>, vector<16x32xbf16>, vector<16x32xf32> -> vector<16x32xf32>
    %7 = vector.broadcast %2 : vector<1x32xf32> to vector<16x32xf32>
    %8 = arith.addf %6, %7 : vector<16x32xf32>
    %9 = arith.negf %8 : vector<16x32xf32>
    %10 = math.exp %9 : vector<16x32xf32>
    %cst_9 = arith.constant 1.000000e+00 : f32
    %11 = vector.broadcast %cst_9 : f32 to vector<16x32xf32>
    %12 = arith.addf %11, %10 : vector<16x32xf32>
    %13 = arith.divf %11, %12 : vector<16x32xf32>
    %14 = arith.truncf %13 : vector<16x32xf32> to vector<16x32xbf16>
    %cst_10 = arith.constant dense<0.000000e+00> : vector<16x16xf32>
    %15 = tpu.matmul %14, %3, %cst_10 {dimension_numbers = #tpu.dot_dimension_numbers<[1], [0], [0], [1], [0, 0, 1, 1], [], []>} : vector<16x32xbf16>, vector<32x16xbf16>, vector<16x16xf32> -> vector<16x16xf32>
    %16 = vector.broadcast %4 : vector<1x16xf32> to vector<16x16xf32>
    %17 = arith.addf %15, %16 : vector<16x16xf32>
    %18 = arith.negf %17 : vector<16x16xf32>
    %19 = math.exp %18 : vector<16x16xf32>
    %cst_11 = arith.constant 1.000000e+00 : f32
    %20 = vector.broadcast %cst_11 : f32 to vector<16x16xf32>
    %21 = arith.addf %20, %19 : vector<16x16xf32>
    %22 = arith.divf %20, %21 : vector<16x16xf32>
    %cst_12 = arith.constant dense<0.000000e+00> : vector<16xf32>
    %23 = vector.multi_reduction <add>, %22, %cst_12 [0] : vector<16x16xf32> to vector<16xf32>
    %24 = vector.shape_cast %23 : vector<16xf32> to vector<1x1x16xf32>
    %25 = arith.mulf %22, %22 : vector<16x16xf32>
    %cst_13 = arith.constant dense<0.000000e+00> : vector<16xf32>
    %26 = vector.multi_reduction <add>, %25, %cst_13 [0] : vector<16x16xf32> to vector<16xf32>
    %27 = vector.shape_cast %26 : vector<16xf32> to vector<1x1x16xf32>
    %28 = vector.shape_cast %24 : vector<1x1x16xf32> to vector<1x1x16xf32>
    %29 = vector.broadcast %28 : vector<1x1x16xf32> to vector<1x8x16xf32>
    %c0_14 = arith.constant 0 : index
    %c0_15 = arith.constant 0 : index
    %c0_16 = arith.constant 0 : index
    %30 = vector.load %arg6[%c0_14, %c0_15, %c0_16] : memref<1x8x16xf32, #tpu.memory_space<vmem>>, vector<1x8x16xf32>
    tpu.vector_store %arg6[%c0_14, %c0_15, %c0_16], %29 {strides = array<i32>} : memref<1x8x16xf32, #tpu.memory_space<vmem>>, vector<1x8x16xf32>,
    %31 = vector.shape_cast %27 : vector<1x1x16xf32> to vector<1x1x16xf32>
    %32 = vector.broadcast %31 : vector<1x1x16xf32> to vector<1x8x16xf32>
    %c0_17 = arith.constant 0 : index
    %c0_18 = arith.constant 0 : index
    %c0_19 = arith.constant 0 : index
    %33 = vector.load %arg7[%c0_17, %c0_18, %c0_19] : memref<1x8x16xf32, #tpu.memory_space<vmem>>, vector<1x8x16xf32>
    tpu.vector_store %arg7[%c0_17, %c0_18, %c0_19], %32 {strides = array<i32>} : memref<1x8x16xf32, #tpu.memory_space<vmem>>, vector<1x8x16xf32>,
    return
  }
  func.func @transform_0(%arg0: i32) -> (i32, i32) {
    %c0_i32 = arith.constant 0 : i32
    %c0_i32_0 = arith.constant 0 : i32
    return %arg0, %c0_i32 : i32, i32
  }
  func.func @transform_1(%arg0: i32) -> (i32, i32) {
    %c0_i32 = arith.constant 0 : i32
    %c0_i32_0 = arith.constant 0 : i32
    %c0_i32_1 = arith.constant 0 : i32
    return %c0_i32, %c0_i32_0 : i32, i32
  }
  func.func @transform_2(%arg0: i32) -> (i32, i32) {
    %c0_i32 = arith.constant 0 : i32
    %c0_i32_0 = arith.constant 0 : i32
    %c0_i32_1 = arith.constant 0 : i32
    return %c0_i32, %c0_i32_0 : i32, i32
  }
  func.func @transform_3(%arg0: i32) -> (i32, i32) {
    %c0_i32 = arith.constant 0 : i32
    %c0_i32_0 = arith.constant 0 : i32
    %c0_i32_1 = arith.constant 0 : i32
    return %c0_i32, %c0_i32_0 : i32, i32
  }
  func.func @transform_4(%arg0: i32) -> (i32, i32) {
    %c0_i32 = arith.constant 0 : i32
    %c0_i32_0 = arith.constant 0 : i32
    %c0_i32_1 = arith.constant 0 : i32
    return %c0_i32, %c0_i32_0 : i32, i32
  }
  func.func @transform_5(%arg0: i32) -> (i32, i32, i32) {
    %c0_i32 = arith.constant 0 : i32
    %c0_i32_0 = arith.constant 0 : i32
    %c0_i32_1 = arith.constant 0 : i32
    return %arg0, %c0_i32, %c0_i32_0 : i32, i32, i32
  }
  func.func @transform_6(%arg0: i32) -> (i32, i32, i32) {
    %c0_i32 = arith.constant 0 : i32
    %c0_i32_0 = arith.constant 0 : i32
    %c0_i32_1 = arith.constant 0 : i32
    return %arg0, %c0_i32, %c0_i32_0 : i32, i32, i32
  }
}

module attributes {stable_mosaic.version = 11 : i64} {
  func.func @_apply_kernel(%arg0: i32, %arg1: memref<16x16xf32, #tpu.memory_space<vmem>>, %arg2: memref<16x32xbf16, #tpu.memory_space<vmem>>, %arg3: memref<1x32xf32, #tpu.memory_space<vmem>>, %arg4: memref<32x16xbf16, #tpu.memory_space<vmem>>, %arg5: memref<1x16xf32, #tpu.memory_space<vmem>>, %arg6: memref<1x16xf32, #tpu.memory_space<vmem>>, %arg7: memref<1x16xf32, #tpu.memory_space<vmem>>, %arg8: memref<16x16xf32, #tpu.memory_space<vmem>>) attributes {dimension_semantics = [#tpu.dimension_semantics<parallel>], iteration_bounds = array<i64: 1>, scalar_prefetch = 0 : i64, scratch_operands = 0 : i64, tpu.core_type = #tpu.core_type<tc>, window_params = [{transform_indices = @transform_0, window_bounds = array<i64: 16, 16>}, {pipeline_mode = #tpu.pipeline_mode<synchronous>, transform_indices = @transform_1, window_bounds = array<i64: 16, 32>}, {pipeline_mode = #tpu.pipeline_mode<synchronous>, transform_indices = @transform_2, window_bounds = array<i64: 1, 32>}, {pipeline_mode = #tpu.pipeline_mode<synchronous>, transform_indices = @transform_3, window_bounds = array<i64: 32, 16>}, {pipeline_mode = #tpu.pipeline_mode<synchronous>, transform_indices = @transform_4, window_bounds = array<i64: 1, 16>}, {pipeline_mode = #tpu.pipeline_mode<synchronous>, transform_indices = @transform_5, window_bounds = array<i64: 1, 16>}, {pipeline_mode = #tpu.pipeline_mode<synchronous>, transform_indices = @transform_6, window_bounds = array<i64: 1, 16>}, {transform_indices = @transform_7, window_bounds = array<i64: 16, 16>}]} {
    %c0 = arith.constant 0 : index
    %c0_0 = arith.constant 0 : index
    %0 = vector.load %arg1[%c0, %c0_0] : memref<16x16xf32, #tpu.memory_space<vmem>>, vector<16x16xf32>
    %c0_1 = arith.constant 0 : index
    %c0_2 = arith.constant 0 : index
    %1 = vector.load %arg2[%c0_1, %c0_2] : memref<16x32xbf16, #tpu.memory_space<vmem>>, vector<16x32xbf16>
    %c0_3 = arith.constant 0 : index
    %c0_4 = arith.constant 0 : index
    %2 = vector.load %arg3[%c0_3, %c0_4] : memref<1x32xf32, #tpu.memory_space<vmem>>, vector<1x32xf32>
    %c0_5 = arith.constant 0 : index
    %c0_6 = arith.constant 0 : index
    %3 = vector.load %arg4[%c0_5, %c0_6] : memref<32x16xbf16, #tpu.memory_space<vmem>>, vector<32x16xbf16>
    %c0_7 = arith.constant 0 : index
    %c0_8 = arith.constant 0 : index
    %4 = vector.load %arg5[%c0_7, %c0_8] : memref<1x16xf32, #tpu.memory_space<vmem>>, vector<1x16xf32>
    %5 = arith.truncf %0 : vector<16x16xf32> to vector<16x16xbf16>
    %cst = arith.constant dense<0.000000e+00> : vector<16x32xf32>
    %6 = tpu.matmul %5, %1, %cst {dimension_numbers = #tpu.dot_dimension_numbers<[1], [0], [0], [1], [0, 0, 1, 1], [], []>} : vector<16x16xbf16>, vector<16x32xbf16>, vector<16x32xf32> -> vector<16x32xf32>
    %7 = vector.broadcast %2 : vector<1x32xf32> to vector<16x32xf32>
    %8 = arith.addf %6, %7 : vector<16x32xf32>
    %9 = arith.negf %8 : vector<16x32xf32>
    %10 = math.exp %9 : vector<16x32xf32>
    %cst_9 = arith.constant 1.000000e+00 : f32
    %11 = vector.broadcast %cst_9 : f32 to vector<16x32xf32>
    %12 = arith.addf %11, %10 : vector<16x32xf32>
    %13 = arith.divf %11, %12 : vector<16x32xf32>
    %14 = arith.truncf %13 : vector<16x32xf32> to vector<16x32xbf16>
    %cst_10 = arith.constant dense<0.000000e+00> : vector<16x16xf32>
    %15 = tpu.matmul %14, %3, %cst_10 {dimension_numbers = #tpu.dot_dimension_numbers<[1], [0], [0], [1], [0, 0, 1, 1], [], []>} : vector<16x32xbf16>, vector<32x16xbf16>, vector<16x16xf32> -> vector<16x16xf32>
    %16 = vector.broadcast %4 : vector<1x16xf32> to vector<16x16xf32>
    %17 = arith.addf %15, %16 : vector<16x16xf32>
    %18 = arith.negf %17 : vector<16x16xf32>
    %19 = math.exp %18 : vector<16x16xf32>
    %cst_11 = arith.constant 1.000000e+00 : f32
    %20 = vector.broadcast %cst_11 : f32 to vector<16x16xf32>
    %21 = arith.addf %20, %19 : vector<16x16xf32>
    %22 = arith.divf %20, %21 : vector<16x16xf32>
    %c0_12 = arith.constant 0 : index
    %c0_13 = arith.constant 0 : index
    %23 = vector.load %arg6[%c0_12, %c0_13] : memref<1x16xf32, #tpu.memory_space<vmem>>, vector<1x16xf32>
    %24 = vector.broadcast %23 : vector<1x16xf32> to vector<16x16xf32>
    %25 = arith.mulf %22, %24 : vector<16x16xf32>
    %c0_14 = arith.constant 0 : index
    %c0_15 = arith.constant 0 : index
    %26 = vector.load %arg7[%c0_14, %c0_15] : memref<1x16xf32, #tpu.memory_space<vmem>>, vector<1x16xf32>
    %27 = vector.broadcast %26 : vector<1x16xf32> to vector<16x16xf32>
    %28 = arith.addf %25, %27 : vector<16x16xf32>
    %c0_16 = arith.constant 0 : index
    %c0_17 = arith.constant 0 : index
    %29 = vector.load %arg8[%c0_16, %c0_17] : memref<16x16xf32, #tpu.memory_space<vmem>>, vector<16x16xf32>
    tpu.vector_store %arg8[%c0_16, %c0_17], %28 {strides = array<i32>} : memref<16x16xf32, #tpu.memory_space<vmem>>, vector<16x16xf32>,
    return
  }
  func.func @transform_0(%arg0: i32) -> (i32, i32) {
    %c0_i32 = arith.constant 0 : i32
    %c0_i32_0 = arith.constant 0 : i32
    return %arg0, %c0_i32 : i32, i32
  }
  func.func @transform_1(%arg0: i32) -> (i32, i32) {
    %c0_i32 = arith.constant 0 : i32
    %c0_i32_0 = arith.constant 0 : i32
    %c0_i32_1 = arith.constant 0 : i32
    return %c0_i32, %c0_i32_0 : i32, i32
  }
  func.func @transform_2(%arg0: i32) -> (i32, i32) {
    %c0_i32 = arith.constant 0 : i32
    %c0_i32_0 = arith.constant 0 : i32
    %c0_i32_1 = arith.constant 0 : i32
    return %c0_i32, %c0_i32_0 : i32, i32
  }
  func.func @transform_3(%arg0: i32) -> (i32, i32) {
    %c0_i32 = arith.constant 0 : i32
    %c0_i32_0 = arith.constant 0 : i32
    %c0_i32_1 = arith.constant 0 : i32
    return %c0_i32, %c0_i32_0 : i32, i32
  }
  func.func @transform_4(%arg0: i32) -> (i32, i32) {
    %c0_i32 = arith.constant 0 : i32
    %c0_i32_0 = arith.constant 0 : i32
    %c0_i32_1 = arith.constant 0 : i32
    return %c0_i32, %c0_i32_0 : i32, i32
  }
  func.func @transform_5(%arg0: i32) -> (i32, i32) {
    %c0_i32 = arith.constant 0 : i32
    %c0_i32_0 = arith.constant 0 : i32
    %c0_i32_1 = arith.constant 0 : i32
    return %c0_i32, %c0_i32_0 : i32, i32
  }
  func.func @transform_6(%arg0: i32) -> (i32, i32) {
    %c0_i32 = arith.constant 0 : i32
    %c0_i32_0 = arith.constant 0 : i32
    %c0_i32_1 = arith.constant 0 : i32
    return %c0_i32, %c0_i32_0 : i32, i32
  }
  func.func @transform_7(%arg0: i32) -> (i32, i32) {
    %c0_i32 = arith.constant 0 : i32
    %c0_i32_0 = arith.constant 0 : i32
    return %arg0, %c0_i32 : i32, i32
  }
}

</mosaic_0001>

<llo_original>
// kernel: enc_linear_forward.2
$region0: #{enc_linear_forward.2}
  #allocation0 [shape = 'u32[]', space=smem, size = 0x4, offset = 0x4, fixed_abs, tag = 'smem constant byte address 0x4 - core index']
  #allocation1 [shape = 'u32[144,128]{1,0:T(1,128)}', space=vmem, size = 0x12000, scoped, tag = 'internal scratch']
  %s0 = inlined_call_operand.vmem [shape: f32[16,16], index: 0, kind: input, shape index: {}]
  %s1 = inlined_call_operand.vmem [shape: bf16[16,32], index: 1, kind: input, shape index: {}]
  %s2 = inlined_call_operand.vmem [shape: f32[1,32], index: 2, kind: input, shape index: {}]
  %s3 = inlined_call_operand.vmem [shape: bf16[32,16], index: 3, kind: input, shape index: {}]
  %s4 = inlined_call_operand.vmem [shape: f32[1,16], index: 4, kind: input, shape index: {}]
  %s5 = inlined_call_operand.vmem [shape: f32[1,8,16], index: 5, kind: output, shape index: {0}]
  %s6 = inlined_call_operand.vmem [shape: f32[1,8,16], index: 6, kind: output, shape index: {1}]
  %7 = xla_tuple %s5, %s6
  %s8 = sld [smem:[#allocation0]]
  $region38: #{enc_linear_forward.2} parent=0
    _
  %s10 = ssub.s32 1, %s8
  %s11 = scalar_select 0, %s10, %s8
  // Predicated region
  $region2: #{enc_linear_forward.2} parent=0 // pred_check
    _
  $region3: #{enc_linear_forward.2} parent=0 // pred_check_branch
    %13 = sbr.rel (0) target = $region5
  $region4: #{enc_linear_forward.2} parent=0 // pred_region
    _
  $region5: #{enc_linear_forward.2} parent=0 // pred_fallthru
    _
  // Predicated region
  $region6: #{enc_linear_forward.2} parent=0 // pred_check
    _
  $region7: #{enc_linear_forward.2} parent=0 // pred_check_branch
    %15 = sbr.rel (0) target = $region9
  $region8: #{enc_linear_forward.2} parent=0 // pred_region
    _
  $region9: #{enc_linear_forward.2} parent=0 // pred_fallthru
    _
  // Predicated region
  $region10: #{enc_linear_forward.2} parent=0 // pred_check
    _
  $region11: #{enc_linear_forward.2} parent=0 // pred_check_branch
    %17 = sbr.rel (0) target = $region13
  $region12: #{enc_linear_forward.2} parent=0 // pred_region
    _
  $region13: #{enc_linear_forward.2} parent=0 // pred_fallthru
    _
  // Predicated region
  $region14: #{enc_linear_forward.2} parent=0 // pred_check
    _
  $region15: #{enc_linear_forward.2} parent=0 // pred_check_branch
    %19 = sbr.rel (0) target = $region17
  $region16: #{enc_linear_forward.2} parent=0 // pred_region
    _
  $region17: #{enc_linear_forward.2} parent=0 // pred_fallthru
    _
  // Predicated region
  $region18: #{enc_linear_forward.2} parent=0 // pred_check
    _
  $region19: #{enc_linear_forward.2} parent=0 // pred_check_branch
    %21 = sbr.rel (0) target = $region21
  $region20: #{enc_linear_forward.2} parent=0 // pred_region
    _
  $region21: #{enc_linear_forward.2} parent=0 // pred_fallthru
    _
  %v23 = vld [vmem:[%s0] sm:$0xff]
  %v24 = vld [vmem:[%s0 + $0x8] sm:$0xff]
  %v25 = vld [vmem:[%s1] sm:$0xf]
  %v26 = vld [vmem:[%s1 + $0x4] sm:$0xf]
  %v27 = vld [vmem:[%s2] sm:$0x1]
  %v28 = vld [vmem:[%s3] sm:$0xf]
  %v29 = vld [vmem:[%s3 + $0x4] sm:$0xf]
  %v30 = vld [vmem:[%s3 + $0x8] sm:$0xf]
  %v31 = vld [vmem:[%s3 + $0xc] sm:$0xf]
  %v32 = vld [vmem:[%s4] sm:$0x1]
  %v33 = vpack.c.bf16 %v24, %v23
  %v35 = vlaneseq
  %v36 = vshrl.u32 %v35, 7
  %v37 = vsub.s32 0, %v36
  %v38 = vrot.slane %v27, %v37
  %v42 = vunpack.c.l.b16 %v25
  %v43 = vunpack.c.l.b16 %v26
  %v44 = vpack.c.b16 %v43, %v42
  %vm46 = vcmask 130048
  %v48 = vsel %vm46, %v33, 0
  %50 = vmatprep.subr.bf16.mxu0 0
  %51 = vmatpush1.bf16.msra.mxu0 %v44
  %52 = vmatprep.subr.bf16.mxu0 0
  %53 = vmatpush1.bf16.msra.mxu0 0
  %54 = vmatprep.subr.bf16.mxu0 0
  %55 = vmatpush1.bf16.msra.mxu0 0
  %56 = vmatprep.subr.bf16.mxu0 0
  %57 = vmatpush1.bf16.msra.mxu0 0
  %58 = vmatprep.subr.bf16.mxu0 0
  %59 = vmatpush1.bf16.msra.mxu0 0
  %60 = vmatprep.subr.bf16.mxu0 0
  %61 = vmatpush1.bf16.msra.mxu0 0
  %62 = vmatprep.subr.bf16.mxu0 0
  %63 = vmatpush1.bf16.msra.mxu0 0
  %64 = vmatprep.subr.bf16.mxu0 0
  %65 = vmatpush1.bf16.msra.mxu0 0
  %66 = vmatprep.subr.bf16.mxu0 0
  %67 = vmatpush1.bf16.msra.mxu0 0
  %68 = vmatprep.subr.bf16.mxu0 0
  %69 = vmatpush1.bf16.msra.mxu0 0
  %70 = vmatprep.subr.bf16.mxu0 0
  %71 = vmatpush1.bf16.msra.mxu0 0
  %72 = vmatprep.subr.bf16.mxu0 0
  %73 = vmatpush1.bf16.msra.mxu0 0
  %74 = vmatprep.subr.bf16.mxu0 0
  %75 = vmatpush1.bf16.msra.mxu0 0
  %76 = vmatprep.subr.bf16.mxu0 0
  %77 = vmatpush1.bf16.msra.mxu0 0
  %78 = vmatprep.subr.bf16.mxu0 0
  %79 = vmatpush1.bf16.msra.mxu0 0
  %80 = vmatprep.subr.bf16.mxu0 0
  %81 = vmatpush1.bf16.msra.mxu0 0
  %82 = vmatprep.mubr.bf16.mxu0 0
  %83 = vmatmul.mubr.bf16.gmra.mrb[0].mxu0 %v48
  %v84 = vpop.f32.mrb[0].mxu0
  %v85 = vadd.f32 %v38, %v84
  %v86 = vpop.f32.mrb[0].mxu0
  %v87 = vpop.f32.mrb[0].mxu0
  %v88 = vadd.f32 %v38, %v87
  %v89 = vpop.f32.mrb[0].mxu0
  %90 = vdwg.mxu0
  %v91 = vxor.u32 %v85, 2147483648
  %v92 = vxor.u32 %v88, 2147483648
  %v93 = vmul.f32 %v91, 1.442695
  %v94 = vpow.pop %v93
  %v95 = vmul.f32 %v92, 1.442695
  %v96 = vpow.pop %v95
  %v97 = vadd.f32 %v94, 1.0
  %v98 = vadd.f32 %v96, 1.0
  %v99 = vrcp.pop %v97
  %v100 = vmul.f32 1.0, %v99
  %v101 = vrcp.pop %v98
  %v102 = vmul.f32 1.0, %v101
  %v103 = vpack.c.bf16 %v102, %v100
  %v105 = vlaneseq
  %v106 = vshrl.u32 %v105, 7
  %v107 = vsub.s32 0, %v106
  %v108 = vrot.slane %v32, %v107
  %v114 = vunpack.c.l.b16 %v28
  %v115 = vunpack.c.l.b16 %v29
  %v116 = vunpack.c.l.b16 %v30
  %v117 = vunpack.c.l.b16 %v31
  %v118 = vpack.c.b16 %v115, %v114
  %v119 = vpack.c.b16 %v117, %v116
  %vm122 = vcmask 261120
  %v124 = vsel %vm122, %v103, 0
  %126 = vmatprep.subr.bf16.mxu0 0
  %127 = vmatpush1.bf16.msra.mxu0 %v118
  %128 = vmatprep.subr.bf16.mxu0 0
  %129 = vmatpush1.bf16.msra.mxu0 %v119
  %130 = vmatprep.subr.bf16.mxu0 0
  %131 = vmatpush1.bf16.msra.mxu0 0
  %132 = vmatprep.subr.bf16.mxu0 0
  %133 = vmatpush1.bf16.msra.mxu0 0
  %134 = vmatprep.subr.bf16.mxu0 0
  %135 = vmatpush1.bf16.msra.mxu0 0
  %136 = vmatprep.subr.bf16.mxu0 0
  %137 = vmatpush1.bf16.msra.mxu0 0
  %138 = vmatprep.subr.bf16.mxu0 0
  %139 = vmatpush1.bf16.msra.mxu0 0
  %140 = vmatprep.subr.bf16.mxu0 0
  %141 = vmatpush1.bf16.msra.mxu0 0
  %142 = vmatprep.subr.bf16.mxu0 0
  %143 = vmatpush1.bf16.msra.mxu0 0
  %144 = vmatprep.subr.bf16.mxu0 0
  %145 = vmatpush1.bf16.msra.mxu0 0
  %146 = vmatprep.subr.bf16.mxu0 0
  %147 = vmatpush1.bf16.msra.mxu0 0
  %148 = vmatprep.subr.bf16.mxu0 0
  %149 = vmatpush1.bf16.msra.mxu0 0
  %150 = vmatprep.subr.bf16.mxu0 0
  %151 = vmatpush1.bf16.msra.mxu0 0
  %152 = vmatprep.subr.bf16.mxu0 0
  %153 = vmatpush1.bf16.msra.mxu0 0
  %154 = vmatprep.subr.bf16.mxu0 0
  %155 = vmatpush1.bf16.msra.mxu0 0
  %156 = vmatprep.subr.bf16.mxu0 0
  %157 = vmatpush1.bf16.msra.mxu0 0
  %158 = vmatprep.mubr.bf16.mxu0 0
  %159 = vmatmul.mubr.bf16.gmra.mrb[0].mxu0 %v124
  %v160 = vpop.f32.mrb[0].mxu0
  %v161 = vadd.f32 %v108, %v160
  %v162 = vpop.f32.mrb[0].mxu0
  %v163 = vpop.f32.mrb[0].mxu0
  %v164 = vadd.f32 %v108, %v163
  %v165 = vpop.f32.mrb[0].mxu0
  %166 = vdwg.mxu0
  %v167 = vxor.u32 %v161, 2147483648
  %v168 = vxor.u32 %v164, 2147483648
  %v169 = vmul.f32 %v167, 1.442695
  %v170 = vpow.pop %v169
  %v171 = vmul.f32 %v168, 1.442695
  %v172 = vpow.pop %v171
  %v173 = vadd.f32 %v170, 1.0
  %v174 = vadd.f32 %v172, 1.0
  %v175 = vrcp.pop %v173
  %v176 = vmul.f32 1.0, %v175
  %v177 = vrcp.pop %v174
  %v178 = vmul.f32 1.0, %v177
  %v179 = vsel %vm46, %v176, 0.0
  %v180 = vsel %vm46, %v178, 0.0
  %v181 = vadd.f32 %v179, %v180
  %v182 = vrot.slane %v181, 4
  %v183 = vadd.f32 %v181, %v182
  %v184 = vrot.slane %v183, 2
  %v185 = vadd.f32 %v183, %v184
  %v186 = vrot.slane %v185, 1
  %v187 = vadd.f32 %v185, %v186
  %v188 = vmul.f32 %v176, %v176
  %v189 = vmul.f32 %v178, %v178
  %v190 = vsel %vm46, %v188, 0.0
  %v191 = vsel %vm46, %v189, 0.0
  %v192 = vadd.f32 %v190, %v191
  %v193 = vrot.slane %v192, 4
  %v194 = vadd.f32 %v192, %v193
  %v195 = vrot.slane %v194, 2
  %v196 = vadd.f32 %v194, %v195
  %v197 = vrot.slane %v196, 1
  %v198 = vadd.f32 %v196, %v197
  %199 = vst.msk [vmem:[%s5] sm:$0xff] %vm46, %v187
  %200 = vst.msk [vmem:[%s6] sm:$0xff] %vm46, %v198
  // Predicated region
  $region22: #{enc_linear_forward.2} parent=0 // pred_check
    _
  $region23: #{enc_linear_forward.2} parent=0 // pred_check_branch
    %202 = sbr.rel (0) target = $region25
  $region24: #{enc_linear_forward.2} parent=0 // pred_region
    _
  $region25: #{enc_linear_forward.2} parent=0 // pred_fallthru
    _
  // Predicated region
  $region26: #{enc_linear_forward.2} parent=0 // pred_check
    _
  $region27: #{enc_linear_forward.2} parent=0 // pred_check_branch
    %204 = sbr.rel (0) target = $region29
  $region28: #{enc_linear_forward.2} parent=0 // pred_region
    _
  $region29: #{enc_linear_forward.2} parent=0 // pred_fallthru
    _
  // Predicated region
  $region30: #{enc_linear_forward.2} parent=0 // pred_check
    _
  $region31: #{enc_linear_forward.2} parent=0 // pred_check_branch
    %206 = sbr.rel (0) target = $region33
  $region32: #{enc_linear_forward.2} parent=0 // pred_region
    _
  $region33: #{enc_linear_forward.2} parent=0 // pred_fallthru
    _
  // Predicated region
  $region34: #{enc_linear_forward.2} parent=0 // pred_check
    _
  $region35: #{enc_linear_forward.2} parent=0 // pred_check_branch
    %208 = sbr.rel (0) target = $region37
  $region36: #{enc_linear_forward.2} parent=0 // pred_region
    _
  $region37: #{enc_linear_forward.2} parent=0 // pred_fallthru
    _

// kernel: enc_linear_forward.3
$region0: #{enc_linear_forward.3}
  #allocation0 [shape = 'u32[]', space=smem, size = 0x4, offset = 0x4, fixed_abs, tag = 'smem constant byte address 0x4 - core index']
  #allocation1 [shape = 'u32[144,128]{1,0:T(1,128)}', space=vmem, size = 0x12000, scoped, tag = 'internal scratch']
  %s0 = inlined_call_operand.vmem [shape: f32[16,16], index: 0, kind: input, shape index: {}]
  %s1 = inlined_call_operand.vmem [shape: bf16[16,32], index: 1, kind: input, shape index: {}]
  %s2 = inlined_call_operand.vmem [shape: f32[1,32], index: 2, kind: input, shape index: {}]
  %s3 = inlined_call_operand.vmem [shape: bf16[32,16], index: 3, kind: input, shape index: {}]
  %s4 = inlined_call_operand.vmem [shape: f32[1,16], index: 4, kind: input, shape index: {}]
  %s5 = inlined_call_operand.vmem [shape: f32[1,16], index: 5, kind: input, shape index: {}]
  %s6 = inlined_call_operand.vmem [shape: f32[1,16], index: 6, kind: input, shape index: {}]
  %s7 = inlined_call_operand.hbm [shape: f32[16,16], index: 7, kind: output, shape index: {}]
  %s8 = sld [smem:[#allocation0]]
  $region38: #{enc_linear_forward.3} parent=0
    _
  %s10 = ssub.s32 1, %s8
  %s11 = scalar_select 0, %s10, %s8
  $region1: #{enc_linear_forward.3} parent=0
    #allocation2 [shape = 'u8[8192]{0}', space=vmem, size = 0x2000, scoped, tag = 'output window, operand 0, single buffered']
    #allocation3 [shape = 's32[1]{0}', space=sflag, size = 0x4, scoped, tag = 'scoped memory for enc_linear_forward.3']
    %12 = vsyncpa [#allocation3], 0
    // Predicated region
    $region2: #{enc_linear_forward.3} parent=1 // pred_check
      _
    $region3: #{enc_linear_forward.3} parent=1 // pred_check_branch
      %14 = sbr.rel (0) target = $region5
    $region4: #{enc_linear_forward.3} parent=1 // pred_region
      _
    $region5: #{enc_linear_forward.3} parent=1 // pred_fallthru
      _
    // Predicated region
    $region6: #{enc_linear_forward.3} parent=1 // pred_check
      _
    $region7: #{enc_linear_forward.3} parent=1 // pred_check_branch
      %16 = sbr.rel (0) target = $region9
    $region8: #{enc_linear_forward.3} parent=1 // pred_region
      _
    $region9: #{enc_linear_forward.3} parent=1 // pred_fallthru
      _
    // Predicated region
    $region10: #{enc_linear_forward.3} parent=1 // pred_check
      _
    $region11: #{enc_linear_forward.3} parent=1 // pred_check_branch
      %18 = sbr.rel (0) target = $region13
    $region12: #{enc_linear_forward.3} parent=1 // pred_region
      _
    $region13: #{enc_linear_forward.3} parent=1 // pred_fallthru
      _
    // Predicated region
    $region14: #{enc_linear_forward.3} parent=1 // pred_check
      _
    $region15: #{enc_linear_forward.3} parent=1 // pred_check_branch
      %20 = sbr.rel (0) target = $region17
    $region16: #{enc_linear_forward.3} parent=1 // pred_region
      _
    $region17: #{enc_linear_forward.3} parent=1 // pred_fallthru
      _
    // Predicated region
    $region18: #{enc_linear_forward.3} parent=1 // pred_check
      _
    $region19: #{enc_linear_forward.3} parent=1 // pred_check_branch
      %22 = sbr.rel (0) target = $region21
    $region20: #{enc_linear_forward.3} parent=1 // pred_region
      _
    $region21: #{enc_linear_forward.3} parent=1 // pred_fallthru
      _
    // Predicated region
    $region22: #{enc_linear_forward.3} parent=1 // pred_check
      _
    $region23: #{enc_linear_forward.3} parent=1 // pred_check_branch
      %24 = sbr.rel (0) target = $region25
    $region24: #{enc_linear_forward.3} parent=1 // pred_region
      _
    $region25: #{enc_linear_forward.3} parent=1 // pred_fallthru
      _
    // Predicated region
    $region26: #{enc_linear_forward.3} parent=1 // pred_check
      _
    $region27: #{enc_linear_forward.3} parent=1 // pred_check_branch
      %26 = sbr.rel (0) target = $region29
    $region28: #{enc_linear_forward.3} parent=1 // pred_region
      _
    $region29: #{enc_linear_forward.3} parent=1 // pred_fallthru
      _
    %v28 = vld [vmem:[%s0] sm:$0xff]
    %v29 = vld [vmem:[%s0 + $0x8] sm:$0xff]
    %v30 = vld [vmem:[%s1] sm:$0xf]
    %v31 = vld [vmem:[%s1 + $0x4] sm:$0xf]
    %v32 = vld [vmem:[%s2] sm:$0x1]
    %v33 = vld [vmem:[%s3] sm:$0xf]
    %v34 = vld [vmem:[%s3 + $0x4] sm:$0xf]
    %v35 = vld [vmem:[%s3 + $0x8] sm:$0xf]
    %v36 = vld [vmem:[%s3 + $0xc] sm:$0xf]
    %v37 = vld [vmem:[%s4] sm:$0x1]
    %v38 = vpack.c.bf16 %v29, %v28
    %v40 = vlaneseq
    %v41 = vshrl.u32 %v40, 7
    %v42 = vsub.s32 0, %v41
    %v43 = vrot.slane %v32, %v42
    %v47 = vunpack.c.l.b16 %v30
    %v48 = vunpack.c.l.b16 %v31
    %v49 = vpack.c.b16 %v48, %v47
    %vm51 = vcmask 130048
    %v53 = vsel %vm51, %v38, 0
    %55 = vmatprep.subr.bf16.mxu0 0
    %56 = vmatpush1.bf16.msra.mxu0 %v49
    %57 = vmatprep.subr.bf16.mxu0 0
    %58 = vmatpush1.bf16.msra.mxu0 0
    %59 = vmatprep.subr.bf16.mxu0 0
    %60 = vmatpush1.bf16.msra.mxu0 0
    %61 = vmatprep.subr.bf16.mxu0 0
    %62 = vmatpush1.bf16.msra.mxu0 0
    %63 = vmatprep.subr.bf16.mxu0 0
    %64 = vmatpush1.bf16.msra.mxu0 0
    %65 = vmatprep.subr.bf16.mxu0 0
    %66 = vmatpush1.bf16.msra.mxu0 0
    %67 = vmatprep.subr.bf16.mxu0 0
    %68 = vmatpush1.bf16.msra.mxu0 0
    %69 = vmatprep.subr.bf16.mxu0 0
    %70 = vmatpush1.bf16.msra.mxu0 0
    %71 = vmatprep.subr.bf16.mxu0 0
    %72 = vmatpush1.bf16.msra.mxu0 0
    %73 = vmatprep.subr.bf16.mxu0 0
    %74 = vmatpush1.bf16.msra.mxu0 0
    %75 = vmatprep.subr.bf16.mxu0 0
    %76 = vmatpush1.bf16.msra.mxu0 0
    %77 = vmatprep.subr.bf16.mxu0 0
    %78 = vmatpush1.bf16.msra.mxu0 0
    %79 = vmatprep.subr.bf16.mxu0 0
    %80 = vmatpush1.bf16.msra.mxu0 0
    %81 = vmatprep.subr.bf16.mxu0 0
    %82 = vmatpush1.bf16.msra.mxu0 0
    %83 = vmatprep.subr.bf16.mxu0 0
    %84 = vmatpush1.bf16.msra.mxu0 0
    %85 = vmatprep.subr.bf16.mxu0 0
    %86 = vmatpush1.bf16.msra.mxu0 0
    %87 = vmatprep.mubr.bf16.mxu0 0
    %88 = vmatmul.mubr.bf16.gmra.mrb[0].mxu0 %v53
    %v89 = vpop.f32.mrb[0].mxu0
    %v90 = vadd.f32 %v43, %v89
    %v91 = vpop.f32.mrb[0].mxu0
    %v92 = vpop.f32.mrb[0].mxu0
    %v93 = vadd.f32 %v43, %v92
    %v94 = vpop.f32.mrb[0].mxu0
    %95 = vdwg.mxu0
    %v96 = vxor.u32 %v90, 2147483648
    %v97 = vxor.u32 %v93, 2147483648
    %v98 = vmul.f32 %v96, 1.442695
    %v99 = vpow.pop %v98
    %v100 = vmul.f32 %v97, 1.442695
    %v101 = vpow.pop %v100
    %v102 = vadd.f32 %v99, 1.0
    %v103 = vadd.f32 %v101, 1.0
    %v104 = vrcp.pop %v102
    %v105 = vmul.f32 1.0, %v104
    %v106 = vrcp.pop %v103
    %v107 = vmul.f32 1.0, %v106
    %v108 = vpack.c.bf16 %v107, %v105
    %v110 = vlaneseq
    %v111 = vshrl.u32 %v110, 7
    %v112 = vsub.s32 0, %v111
    %v113 = vrot.slane %v37, %v112
    %v119 = vunpack.c.l.b16 %v33
    %v120 = vunpack.c.l.b16 %v34
    %v121 = vunpack.c.l.b16 %v35
    %v122 = vunpack.c.l.b16 %v36
    %v123 = vpack.c.b16 %v120, %v119
    %v124 = vpack.c.b16 %v122, %v121
    %vm127 = vcmask 261120
    %v129 = vsel %vm127, %v108, 0
    %131 = vmatprep.subr.bf16.mxu0 0
    %132 = vmatpush1.bf16.msra.mxu0 %v123
    %133 = vmatprep.subr.bf16.mxu0 0
    %134 = vmatpush1.bf16.msra.mxu0 %v124
    %135 = vmatprep.subr.bf16.mxu0 0
    %136 = vmatpush1.bf16.msra.mxu0 0
    %137 = vmatprep.subr.bf16.mxu0 0
    %138 = vmatpush1.bf16.msra.mxu0 0
    %139 = vmatprep.subr.bf16.mxu0 0
    %140 = vmatpush1.bf16.msra.mxu0 0
    %141 = vmatprep.subr.bf16.mxu0 0
    %142 = vmatpush1.bf16.msra.mxu0 0
    %143 = vmatprep.subr.bf16.mxu0 0
    %144 = vmatpush1.bf16.msra.mxu0 0
    %145 = vmatprep.subr.bf16.mxu0 0
    %146 = vmatpush1.bf16.msra.mxu0 0
    %147 = vmatprep.subr.bf16.mxu0 0
    %148 = vmatpush1.bf16.msra.mxu0 0
    %149 = vmatprep.subr.bf16.mxu0 0
    %150 = vmatpush1.bf16.msra.mxu0 0
    %151 = vmatprep.subr.bf16.mxu0 0
    %152 = vmatpush1.bf16.msra.mxu0 0
    %153 = vmatprep.subr.bf16.mxu0 0
    %154 = vmatpush1.bf16.msra.mxu0 0
    %155 = vmatprep.subr.bf16.mxu0 0
    %156 = vmatpush1.bf16.msra.mxu0 0
    %157 = vmatprep.subr.bf16.mxu0 0
    %158 = vmatpush1.bf16.msra.mxu0 0
    %159 = vmatprep.subr.bf16.mxu0 0
    %160 = vmatpush1.bf16.msra.mxu0 0
    %161 = vmatprep.subr.bf16.mxu0 0
    %162 = vmatpush1.bf16.msra.mxu0 0
    %163 = vmatprep.mubr.bf16.mxu0 0
    %164 = vmatmul.mubr.bf16.gmra.mrb[0].mxu0 %v129
    %v165 = vpop.f32.mrb[0].mxu0
    %v166 = vadd.f32 %v113, %v165
    %v167 = vpop.f32.mrb[0].mxu0
    %v168 = vpop.f32.mrb[0].mxu0
    %v169 = vadd.f32 %v113, %v168
    %v170 = vpop.f32.mrb[0].mxu0
    %171 = vdwg.mxu0
    %v172 = vxor.u32 %v166, 2147483648
    %v173 = vxor.u32 %v169, 2147483648
    %v174 = vmul.f32 %v172, 1.442695
    %v175 = vpow.pop %v174
    %v176 = vmul.f32 %v173, 1.442695
    %v177 = vpow.pop %v176
    %v178 = vadd.f32 %v175, 1.0
    %v179 = vadd.f32 %v177, 1.0
    %v180 = vrcp.pop %v178
    %v181 = vmul.f32 1.0, %v180
    %v182 = vrcp.pop %v179
    %v183 = vmul.f32 1.0, %v182
    %v184 = vld [vmem:[%s5] sm:$0x1]
    %v186 = vlaneseq
    %v187 = vshrl.u32 %v186, 7
    %v188 = vsub.s32 0, %v187
    %v189 = vrot.slane %v184, %v188
    %v191 = vmul.f32 %v181, %v189
    %v192 = vmul.f32 %v183, %v189
    %v193 = vld [vmem:[%s6] sm:$0x1]
    %v195 = vlaneseq
    %v196 = vshrl.u32 %v195, 7
    %v197 = vsub.s32 0, %v196
    %v198 = vrot.slane %v193, %v197
    %v200 = vadd.f32 %v191, %v198
    %v201 = vadd.f32 %v192, %v198
    %202 = vst.msk [vmem:[#allocation2] sm:$0xff] %vm51, %v200
    %203 = vst.msk [vmem:[#allocation2 + $0x8] sm:$0xff] %vm51, %v201
    // Predicated region
    $region30: #{enc_linear_forward.3} parent=1 // pred_check
      _
    $region31: #{enc_linear_forward.3} parent=1 // pred_check_branch
      %205 = sbr.rel (0) target = $region33
    $region32: #{enc_linear_forward.3} parent=1 // pred_region
      %s207 = ssub.s32 256, 256
      %208 = vsyncadd [#allocation3], %s207
      %s209 = sshll.u32 [#allocation2], 4
      %s210 = int_to_ptr.vmem [resolvable:$true] %s209
      %215 = dma.vmem_to_hbm [thread:$0]  %s210, 256, %s7, [#allocation3], 128, 128, 8
    $region33: #{enc_linear_forward.3} parent=1 // pred_fallthru
      _
    // Predicated region
    $region34: #{enc_linear_forward.3} parent=1 // pred_check
      _
    $region35: #{enc_linear_forward.3} parent=1 // pred_check_branch
      %217 = sbr.rel (0) target = $region37
    $region36: #{enc_linear_forward.3} parent=1 // pred_region
      %218 = dma.done [#allocation3], 256
    $region37: #{enc_linear_forward.3} parent=1 // pred_fallthru
      _
    %219 = vsyncpa [#allocation3], 1

</llo_original>
